<compile_context>
chip_gen: v7x
topology: tpu7x:2x2x1
jax: 0.10.0
libtpu: 0.0.40
codegen_flags: <defaults>
</compile_context>

<pallas_src>
import functools

import jax
import jax.numpy as jnp
from jax.experimental import pallas as pl
from jax.experimental.pallas import tpu as pltpu


# ----------------------------------------------------------------------------
# Sinusoidal table (plain JAX, cached). Returned flat as (1, seq*hidden).
# ----------------------------------------------------------------------------
@functools.lru_cache(maxsize=64)
def _cached_encodings(seq: int, hidden: int, context_window: int, dtype_name: str):
    pos = jnp.arange(seq, dtype=jnp.float32)[:, None]                     # (S, 1)
    i = jnp.arange(hidden, dtype=jnp.float32)[None, :]                    # (1, H)
    # pos / 10000**(2*i/context_window)  ==  pos * exp(-(2*i/cw) * ln(10000))
    inv_freq = jnp.exp(-(2.0 * i / float(context_window)) * jnp.log(10000.0))
    angle = pos * inv_freq                                                # (S, H)
    parity = jnp.arange(hidden, dtype=jnp.int32)[None, :] & 1
    enc = jnp.where(parity == 0, jnp.sin(angle), jnp.cos(angle))
    return enc.astype(jnp.dtype(dtype_name)).reshape(1, seq * hidden)


# ----------------------------------------------------------------------------
# Kernel: one broadcast VPU add on lane-dense blocks.
# ----------------------------------------------------------------------------
def _add_enc_kernel(x_ref, enc_ref, o_ref):
    # x_ref/o_ref: (Bb, TC); enc_ref: (1, TC)
    o_ref[...] = x_ref[...] + enc_ref[...]


def _tpu_vmem_bytes() -> int:
    try:
        return int(pltpu.get_tpu_info().vmem_capacity_bytes)
    except Exception:
        return 64 * 1024 * 1024  # conservative fallback: v7x per-TensorCore VMEM


# ----------------------------------------------------------------------------
# Wrapper
# ----------------------------------------------------------------------------
def positional_encoding(x: jnp.ndarray, context_window: int,
                        *, donate_x: bool = False,
                        _target_block_bytes: int | None = None) -> jnp.ndarray:
    """x: (batch, seq, hidden) -> x + sinusoidal positional encodings."""
    B, S, H = x.shape
    dtype = x.dtype
    itemsize = jnp.dtype(dtype).itemsize
    SH = S * H

    enc = _cached_encodings(S, H, int(context_window), jnp.dtype(dtype).name)

    # Generation-aware block budget / VMEM limit.
    vmem_cap = _tpu_vmem_bytes()
    if vmem_cap >= 96 * 1024 * 1024:      # v5e / v6e: 128 MiB per TensorCore
        target = 8 << 20
        vmem_limit = 64 << 20
    else:                                  # v7x: 64 MiB per TensorCore (or unknown)
        target = 4 << 20
        vmem_limit = 40 << 20
    if _target_block_bytes is not None:
        target = int(_target_block_bytes)

    sub = {1: 32, 2: 16}.get(itemsize, 8)  # native sublane packing per dtype

    # Column tile: the full row if it fits, otherwise a multiple of 128 lanes.
    rows_min = B if B <= sub else sub
    if SH * itemsize * rows_min <= target:
        TC = SH
    else:
        TC = max(128, (target // (rows_min * itemsize)) // 128 * 128)
    n_c = pl.cdiv(SH, TC)

    # Fold batch rows into the block so each grid step moves MiB, not KiB.
    rows_fit = max(rows_min, target // max(1, TC * itemsize))
    if B <= rows_fit:
        Bb = B                              # full batch dim (always legal)
    else:
        Bb = max(sub, (rows_fit // sub) * sub)  # sublane-aligned
    n_b = pl.cdiv(B, Bb)

    # Megacore nudge (v7x has 2 TensorCores): avoid a single-block grid for
    # medium sizes; keep column tiles 128-aligned.
    if n_c == 1 and n_b == 1 and B * SH * itemsize > (512 << 10) and SH >= 256:
        TC = max(128, (SH // 2) // 128 * 128)
        n_c = pl.cdiv(SH, TC)

    x2 = x.reshape(B, SH)                   # layout-free reshape (row-major)

    cost = pl.CostEstimate(
        flops=B * SH,
        transcendentals=0,
        bytes_accessed=(2 * B * SH + SH) * itemsize,
    )

    # Grid order (columns, batch): enc's block index is constant across the
    # inner batch axis, so it stays VMEM-resident and is not re-DMA'd per step.
    out = pl.pallas_call(
        _add_enc_kernel,
        out_shape=jax.ShapeDtypeStruct((B, SH), dtype),
        grid=(n_c, n_b),
        in_specs=[
            pl.BlockSpec((Bb, TC), lambda c, b: (b, c)),   # x
            pl.BlockSpec((1, TC), lambda c, b: (0, c)),    # enc (batch-invariant)
        ],
        out_specs=pl.BlockSpec((Bb, TC), lambda c, b: (b, c)),
        compiler_params=pltpu.CompilerParams(
            dimension_semantics=("parallel", "parallel"),
            vmem_limit_bytes=vmem_limit,
        ),
        cost_estimate=cost,
        input_output_aliases=({0: 0} if donate_x else {}),
    )(x2, enc)
    return out.reshape(B, S, H)


# ----------------------------------------------------------------------------
# Pure-JAX reference (mirror of the PyTorch module)
# ----------------------------------------------------------------------------
def _reference(x: jnp.ndarray, context_window: int) -> jnp.ndarray:
    B, S, H = x.shape
    pos = jnp.arange(S, dtype=jnp.float32)[:, None]
    i = jnp.arange(H, dtype=jnp.float32)[None, :]
    angle = pos / (10000.0 ** (2.0 * i / float(context_window)))
    enc = jnp.where((jnp.arange(H)[None, :] % 2) == 0,
                    jnp.sin(angle), jnp.cos(angle)).astype(x.dtype)
    return x + enc[None, :, :]


if __name__ == "__main__":
    # Shapes consistent with the module: seq=8, hidden(residual_stream)=32.
    batch, seq, hidden = 2, 8, 32
    context_window = 16

    key = jax.random.PRNGKey(0)
    x = jax.random.normal(key, (batch, seq, hidden), dtype=jnp.float32)

    # 1) Natural path (single lane-dense block).
    out = jax.block_until_ready(positional_encoding(x, context_window))
    ref = _reference(x, context_window)
    assert out.shape == x.shape and out.dtype == x.dtype
    assert jnp.allclose(out, ref, atol=1e-5, rtol=1e-5)

    # 2) Tiled path (128-aligned column tiles + batch folding), forced via a
    #    small block budget to exercise the multi-block grid.
    x_big = jax.random.normal(jax.random.PRNGKey(1), (4, 64, 128), dtype=jnp.float32)
    out_big = jax.block_until_ready(
        positional_encoding(x_big, context_window, _target_block_bytes=16 << 10))
    ref_big = _reference(x_big, context_window)
    assert jnp.allclose(out_big, ref_big, atol=1e-5, rtol=1e-5)

    print("KERNEL_OK")
</pallas_src>

<mosaic_0001>
module attributes {stable_mosaic.version = 11 : i64} {
  func.func @_add_enc_kernel(%arg0: i32, %arg1: i32, %arg2: memref<2x256xf32, #tpu.memory_space<vmem>>, %arg3: memref<1x256xf32, #tpu.memory_space<vmem>>, %arg4: memref<2x256xf32, #tpu.memory_space<vmem>>) attributes {dimension_semantics = [#tpu.dimension_semantics<parallel>, #tpu.dimension_semantics<parallel>], iteration_bounds = array<i64: 1, 1>, scalar_prefetch = 0 : i64, scratch_operands = 0 : i64, tpu.core_type = #tpu.core_type<tc>, window_params = [{transform_indices = @transform_0, window_bounds = array<i64: 2, 256>}, {transform_indices = @transform_1, window_bounds = array<i64: 1, 256>}, {transform_indices = @transform_2, window_bounds = array<i64: 2, 256>}]} {
    %c0 = arith.constant 0 : index
    %c0_0 = arith.constant 0 : index
    %0 = vector.load %arg2[%c0, %c0_0] : memref<2x256xf32, #tpu.memory_space<vmem>>, vector<2x256xf32>
    %c0_1 = arith.constant 0 : index
    %c0_2 = arith.constant 0 : index
    %1 = vector.load %arg3[%c0_1, %c0_2] : memref<1x256xf32, #tpu.memory_space<vmem>>, vector<1x256xf32>
    %2 = vector.broadcast %1 : vector<1x256xf32> to vector<2x256xf32>
    %3 = arith.addf %0, %2 : vector<2x256xf32>
    %c0_3 = arith.constant 0 : index
    %c0_4 = arith.constant 0 : index
    %4 = vector.load %arg4[%c0_3, %c0_4] : memref<2x256xf32, #tpu.memory_space<vmem>>, vector<2x256xf32>
    tpu.vector_store %arg4[%c0_3, %c0_4], %3 {strides = array<i32>} : memref<2x256xf32, #tpu.memory_space<vmem>>, vector<2x256xf32>,
    return
  }
  func.func @transform_0(%arg0: i32, %arg1: i32) -> (i32, i32) {
    %c0_i32 = arith.constant 0 : i32
    return %arg1, %arg0 : i32, i32
  }
  func.func @transform_1(%arg0: i32, %arg1: i32) -> (i32, i32) {
    %c0_i32 = arith.constant 0 : i32
    %c0_i32_0 = arith.constant 0 : i32
    return %c0_i32, %arg0 : i32, i32
  }
  func.func @transform_2(%arg0: i32, %arg1: i32) -> (i32, i32) {
    %c0_i32 = arith.constant 0 : i32
    return %arg1, %arg0 : i32, i32
  }
}

</mosaic_0001>

<llo_original>
// kernel: tpu_custom_call.1
$region0: #{tpu_custom_call.1}
  #allocation0 [shape = 'u32[]', space=smem, size = 0x4, offset = 0x4, fixed_abs, tag = 'smem constant byte address 0x4 - core index']
  #allocation1 [shape = 'u32[144,128]{1,0:T(1,128)}', space=vmem, size = 0x12000, scoped, tag = 'internal scratch']
  %s0 = inlined_call_operand.hbm [shape: f32[2,256], index: 0, kind: input, shape index: {}]
  %s1 = inlined_call_operand.vmem [shape: f32[1,256], index: 1, kind: input, shape index: {}]
  %s2 = inlined_call_operand.hbm [shape: f32[2,256], index: 2, kind: output, shape index: {}]
  %s3 = sld [smem:[#allocation0]]
  $region22: #{tpu_custom_call.1} parent=0
    _
  %s5 = ssub.s32 1, %s3
  %s6 = scalar_select 0, %s5, %s3
  $region1: #{tpu_custom_call.1} parent=0
    #allocation2 [shape = 'u8[2048]{0}', space=vmem, size = 0x800, scoped, tag = 'input window, operand 0, single buffered']
    #allocation3 [shape = 's32[1]{0}', space=sflag, size = 0x4, scoped, tag = 'scoped memory for tpu_custom_call.1']
    #allocation4 [shape = 's32[1]{0}', space=sflag, size = 0x4, scoped, tag = 'scoped memory for tpu_custom_call.1']
    #allocation5 [shape = 'u8[2048]{0}', space=vmem, size = 0x800, scoped, tag = 'output window, operand 0, single buffered']
    %7 = vsyncpa [#allocation3], 0
    %8 = vsyncpa [#allocation4], 0
    // Predicated region
    $region2: #{tpu_custom_call.1} parent=1 // pred_check
      _
    $region3: #{tpu_custom_call.1} parent=1 // pred_check_branch
      %10 = sbr.rel (0) target = $region5
    $region4: #{tpu_custom_call.1} parent=1 // pred_region
      %s12 = ssub.s32 64, 64
      %13 = vsyncadd [#allocation3], %s12
      %s15 = sshll.u32 [#allocation2], 4
      %s16 = int_to_ptr.vmem [resolvable:$true] %s15
      %18 = dma.hbm_to_vmem [thread:$0]  %s0, 64, %s16, [#allocation3]
    $region5: #{tpu_custom_call.1} parent=1 // pred_fallthru
      _
    // Predicated region
    $region6: #{tpu_custom_call.1} parent=1 // pred_check
      _
    $region7: #{tpu_custom_call.1} parent=1 // pred_check_branch
      %20 = sbr.rel (0) target = $region9
    $region8: #{tpu_custom_call.1} parent=1 // pred_region
      _
    $region9: #{tpu_custom_call.1} parent=1 // pred_fallthru
      _
    // Predicated region
    $region10: #{tpu_custom_call.1} parent=1 // pred_check
      _
    $region11: #{tpu_custom_call.1} parent=1 // pred_check_branch
      %22 = sbr.rel (0) target = $region13
    $region12: #{tpu_custom_call.1} parent=1 // pred_region
      %23 = dma.done [#allocation3], 64
    $region13: #{tpu_custom_call.1} parent=1 // pred_fallthru
      _
    %v24 = vld [vmem:[#allocation2] sm:$0xf]
    %v25 = vld [vmem:[%s1] sm:$0x3]
    %v27 = vlaneseq
    %v28 = vshrl.u32 %v27, 7
    %v29 = vsub.s32 0, %v28
    %v30 = vrot.slane %v25, %v29
    %v31 = vlaneseq
    %v32 = vshrl.u32 %v31, 7
    %v33 = vsub.s32 1, %v32
    %v34 = vrot.slane %v25, %v33
    %v35 = vcombine.low %v30, %v34
    %v37 = vunpack.c.l.s4 1983009808
    %v38 = vunpack.c.0.s8 %v37
    %v39 = vlaneseq
    %v40 = vshrl.u32 %v39, 7
    %v41 = vsub.s32 %v38, %v40
    %v42 = vrot.slane %v35, %v41
    %v44 = vadd.f32 %v24, %v42
    %45 = vst [vmem:[#allocation5] sm:$0xf] %v44
    // Predicated region
    $region14: #{tpu_custom_call.1} parent=1 // pred_check
      _
    $region15: #{tpu_custom_call.1} parent=1 // pred_check_branch
      %47 = sbr.rel (0) target = $region17
    $region16: #{tpu_custom_call.1} parent=1 // pred_region
      %s49 = ssub.s32 64, 64
      %50 = vsyncadd [#allocation4], %s49
      %s52 = sshll.u32 [#allocation5], 4
      %s53 = int_to_ptr.vmem [resolvable:$true] %s52
      %55 = dma.vmem_to_hbm [thread:$0]  %s53, 64, %s2, [#allocation4]
    $region17: #{tpu_custom_call.1} parent=1 // pred_fallthru
      _
    // Predicated region
    $region18: #{tpu_custom_call.1} parent=1 // pred_check
      _
    $region19: #{tpu_custom_call.1} parent=1 // pred_check_branch
      %57 = sbr.rel (0) target = $region21
    $region20: #{tpu_custom_call.1} parent=1 // pred_region
      %58 = dma.done [#allocation4], 64
    $region21: #{tpu_custom_call.1} parent=1 // pred_fallthru
      _
    %59 = vsyncpa [#allocation3], 1
    %60 = vsyncpa [#allocation4], 1

</llo_original>
